<compile_context>
chip_gen: v6e
topology: v6e:2x2x1
jax: 0.10.0
libtpu: 0.0.40
codegen_flags: <defaults>
</compile_context>

<pallas_src>
import math
from functools import partial

import jax
import jax.numpy as jnp
from jax.experimental import pallas as pl
from jax.experimental.pallas import tpu as pltpu


def _dcl_kernel(xr_ref, xc_ref, lr_ref, lc_ref, o_ref, pos_acc, neg_acc,
                *, n_pad_cols):
    """Grid point (i, j): row tile i (tm rows, resident) x column tile j (tn).

    xr_ref : VMEM (tm, D)  pre-normalized rows whose losses we accumulate
    xc_ref : VMEM (tn, D)  pre-normalized columns being reduced over (streamed)
    lr_ref : VMEM (1, tm)  labels of the row tile (lane orientation)
    lc_ref : VMEM (tn, 1)  labels of the column tile (sublane orientation)
    o_ref  : VMEM (1, tm)  per-row loss (written on the last column tile)
    pos_acc, neg_acc : VMEM (1, tm) f32 accumulators
    """
    j = pl.program_id(1)

    @pl.when(j == 0)
    def _init():
        pos_acc[...] = jnp.zeros_like(pos_acc)
        neg_acc[...] = jnp.zeros_like(neg_acc)

    # a[c, r] = <x_c, x_r> / (||x_c|| ||x_r|| t): operands were normalized and
    # scaled by sqrt(1/t) in the wrapper, so the MXU emits angle/t directly.
    # Contraction is the last dim of both operands (A @ B^T form) -> no
    # in-kernel transpose of the resident row tile.
    a = jax.lax.dot_general(
        xc_ref[...], xr_ref[...],
        dimension_numbers=(((1,), (1,)), ((), ())),
        preferred_element_type=jnp.float32)                   # [tn, tm] f32

    e = jnp.exp(a)                                            # single EUP pass
    pos = (lc_ref[...] == lr_ref[...]).astype(jnp.float32)    # [tn,1]==[1,tm]

    tn_f = jnp.float32(xc_ref.shape[0])
    s_e = jnp.sum(e, axis=0, keepdims=True)                   # [1, tm]
    s_pe = jnp.sum(e * pos, axis=0, keepdims=True)            # positives' exp
    c_p = jnp.sum(pos, axis=0, keepdims=True)                 # positive count

    # torch.mul(bool_mask, a) semantics: exp(0) == 1 on the masked-out entries.
    pos_acc[...] += s_pe + (tn_f - c_p)        # pos: exp(a) on pos, 1 on neg
    neg_acc[...] += (s_e - s_pe) + c_p         # neg: exp(a) on neg, 1 on pos

    @pl.when(j == pl.num_programs(1) - 1)
    def _finish():
        # Padded (all-zero) columns contributed exactly 1.0 to both sums.
        pad = jnp.float32(n_pad_cols)
        o_ref[...] = (jnp.log(neg_acc[...] - pad)
                      - jnp.log(pos_acc[...] - pad))


def _round_up(a, b):
    return (a + b - 1) // b * b


def decouple_contrastive_loss(represent, label, t, d=None, *,
                              block_m=512, block_n=512,
                              use_bf16_matmul=True, xc_buffer_depth=2):
    """Decoupled contrastive loss (matches the PyTorch reference forward).

    represent: [N, D] float array, label: [N] int array, t: temperature.
    `d` (device of the reference's unused `zero` tensor) is dead code: ignored.
    block_m / block_n should be powers of two (>= 128) in the tiled path.
    """
    del d
    n, dim = represent.shape
    x = represent.astype(jnp.float32)
    lab = label.astype(jnp.int32)

    # One-shot normalization + sqrt(1/t) fold (review item: hoist out of kernel).
    # eps guard keeps appended zero-pad rows exactly zero; a genuinely all-zero
    # input row yields 0 here instead of the reference's NaN (documented parity
    # deviation, only on degenerate input).
    sumsq = jnp.sum(x * x, axis=-1, keepdims=True)
    inv_norm = jax.lax.rsqrt(jnp.maximum(sumsq, jnp.float32(1e-30)))
    xn = x * (inv_norm * jax.lax.rsqrt(jnp.asarray(t, jnp.float32)))
    if use_bf16_matmul:
        xn = xn.astype(jnp.bfloat16)     # MXU-native; halves streamed HBM bytes

    # Tile sizing. Single full-array tile only when N cannot fill one block;
    # otherwise keep >= 2 row tiles so both v7x TensorCores get work.
    if n <= min(block_m, block_n):
        tm = tn = n_pad = n
    else:
        tm, tn = block_m, block_n
        while tm > 128 and -(-n // tm) < 2:
            tm //= 2
        n_pad = _round_up(n, math.lcm(tm, tn))

    if n_pad != n:
        # Zero rows: dot with anything is exactly 0 -> exp(0) = 1 -> corrected
        # by the scalar subtraction in the kernel finalizer. Label value of the
        # padding is irrelevant (both branches contribute 1); use -1 for clarity.
        xn = jnp.concatenate(
            [xn, jnp.zeros((n_pad - n, dim), xn.dtype)], axis=0)
        lab_p = jnp.concatenate(
            [lab, jnp.full((n_pad - n,), -1, jnp.int32)], axis=0)
    else:
        lab_p = lab

    lab_row = lab_p.reshape(1, n_pad)      # lane orientation
    lab_col = lab_p.reshape(n_pad, 1)      # sublane orientation

    grid = (n_pad // tm, n_pad // tn)      # reduction (column) axis last

    # Explicit scoped-VMEM budget only when the tiles outgrow the default limit
    # (v5e 16 MiB / v6e-v7x 32 MiB scoped); capped by physical VMEM (v7x 64 MiB).
    itemsize = jnp.dtype(xn.dtype).itemsize
    budget = (2 * (tm + tn) * dim * itemsize        # double-buffered x tiles
              + 2 * (tm + tn) * 4                   # label tiles
              + 6 * tm * tn * 4                     # a/e/mask intermediates
              + 4 * tm * 4)                         # accumulators + output
    vmem_limit = None
    if budget > (24 << 20):
        try:
            cap = int(pltpu.get_tpu_info().vmem_capacity_bytes)
        except Exception:
            cap = 64 << 20
        vmem_limit = int(min(budget * 5 // 4, cap * 3 // 4))

    # Optional deeper buffering on the streamed column tile only (the resident
    # row tile is revisited across j and gains nothing from extra buffers).
    xc_kwargs = {}
    if xc_buffer_depth > 2:
        xc_kwargs = dict(pipeline_mode=pl.Buffered(xc_buffer_depth))

    kernel = partial(_dcl_kernel, n_pad_cols=n_pad - n)

    row_loss = pl.pallas_call(
        kernel,
        out_shape=jax.ShapeDtypeStruct((1, n_pad), jnp.float32),
        grid_spec=pltpu.PrefetchScalarGridSpec(
            num_scalar_prefetch=0,
            grid=grid,
            in_specs=[
                pl.BlockSpec((tm, dim), lambda i, j: (i, 0)),   # resident rows
                pl.BlockSpec((tn, dim), lambda i, j: (j, 0),    # streamed cols
                             **xc_kwargs),
                pl.BlockSpec((1, tm), lambda i, j: (0, i)),     # labels (lane)
                pl.BlockSpec((tn, 1), lambda i, j: (j, 0)),     # labels (sublane)
            ],
            out_specs=pl.BlockSpec((1, tm), lambda i, j: (0, i)),
            scratch_shapes=[pltpu.VMEM((1, tm), jnp.float32),
                            pltpu.VMEM((1, tm), jnp.float32)],
        ),
        compiler_params=pltpu.CompilerParams(
            dimension_semantics=("parallel", "arbitrary"),
            vmem_limit_bytes=vmem_limit),
    )(xn, xn, lab_row, lab_col)

    return jnp.sum(row_loss[0, :n]) / n


def _reference(represent, label, t):
    x = represent.astype(jnp.float32)
    c3 = jnp.dot(x, x.T, precision=jax.lax.Precision.HIGHEST)
    c1 = jnp.sqrt(jnp.sum(x * x, axis=-1, keepdims=True))
    angle = c3 / (c1 * c1.T)
    lab = label.reshape(-1, 1)
    pos = lab == lab.T
    a = angle / t
    pos_loss = jnp.sum(jnp.exp(jnp.where(pos, a, 0.0)), axis=-1)
    neg_loss = jnp.sum(jnp.exp(jnp.where(pos, 0.0, a)), axis=-1)
    return jnp.sum(jnp.log(neg_loss) - jnp.log(pos_loss)) / x.shape[0]


if __name__ == "__main__":
    key = jax.random.PRNGKey(0)
    k1, k2, k3, k4 = jax.random.split(key, 4)
    t = 0.07

    # Case 1: tiny, single-tile path, f32 MXU path (strict tolerance).
    N1, D1 = 32, 64
    x1 = jax.random.normal(k1, (N1, D1), dtype=jnp.float32)
    y1 = jax.random.randint(k2, (N1,), 0, 4, dtype=jnp.int32)
    out1 = jax.block_until_ready(
        decouple_contrastive_loss(x1, y1, t, use_bf16_matmul=False))
    ref1 = _reference(x1, y1, t)
    assert jnp.allclose(out1, ref1, rtol=1e-4, atol=1e-4), (out1, ref1)

    # Case 2: tiled + zero-padded path (200 -> 256, grid (2, 2)), f32 path.
    N2, D2 = 200, 128
    x2 = jax.random.normal(k3, (N2, D2), dtype=jnp.float32)
    y2 = jax.random.randint(k4, (N2,), 0, 8, dtype=jnp.int32)
    out2 = jax.block_until_ready(
        decouple_contrastive_loss(x2, y2, t, block_m=128, block_n=128,
                                  use_bf16_matmul=False))
    ref2 = _reference(x2, y2, t)
    assert jnp.allclose(out2, ref2, rtol=1e-4, atol=1e-4), (out2, ref2)

    # Case 3: default fast path (bf16 matmul, default tiles -> single tile).
    out3 = jax.block_until_ready(decouple_contrastive_loss(x2, y2, t))
    assert jnp.allclose(out3, ref2, rtol=2e-2, atol=5e-2), (out3, ref2)

    # Case 4: tiled + padded + bf16 (default) path.
    out4 = jax.block_until_ready(
        decouple_contrastive_loss(x2, y2, t, block_m=128, block_n=128))
    assert jnp.allclose(out4, ref2, rtol=2e-2, atol=5e-2), (out4, ref2)

    print("KERNEL_OK")
</pallas_src>

<mosaic_0001>
module attributes {stable_mosaic.version = 11 : i64} {
  func.func @_dcl_kernel(%arg0: i32, %arg1: i32, %arg2: memref<32x64xf32, #tpu.memory_space<vmem>>, %arg3: memref<32x64xf32, #tpu.memory_space<vmem>>, %arg4: memref<1x32xi32, #tpu.memory_space<vmem>>, %arg5: memref<32x1xi32, #tpu.memory_space<vmem>>, %arg6: memref<1x32xf32, #tpu.memory_space<vmem>>, %arg7: memref<1x32xf32, #tpu.memory_space<vmem>>, %arg8: memref<1x32xf32, #tpu.memory_space<vmem>>) attributes {dimension_semantics = [#tpu.dimension_semantics<parallel>, #tpu.dimension_semantics<arbitrary>], iteration_bounds = array<i64: 1, 1>, scalar_prefetch = 0 : i64, scratch_operands = 2 : i64, tpu.core_type = #tpu.core_type<tc>, window_params = [{transform_indices = @transform_0, window_bounds = array<i64: 32, 64>}, {transform_indices = @transform_1, window_bounds = array<i64: 32, 64>}, {transform_indices = @transform_2, window_bounds = array<i64: 1, 32>}, {transform_indices = @transform_3, window_bounds = array<i64: 32, 1>}, {transform_indices = @transform_4, window_bounds = array<i64: 1, 32>}]} {
    %c0_i32 = arith.constant 0 : i32
    %0 = arith.cmpi eq, %arg1, %c0_i32 : i32
    %1 = arith.extui %0 : i1 to i32
    %c0_i32_0 = arith.constant 0 : i32
    %2 = arith.cmpi ne, %1, %c0_i32_0 : i32
    scf.if %2 {
      %cst_22 = arith.constant 0.000000e+00 : f32
      %35 = vector.broadcast %cst_22 : f32 to vector<1x32xf32>
      %c0_23 = arith.constant 0 : index
      %c0_24 = arith.constant 0 : index
      %36 = vector.load %arg7[%c0_23, %c0_24] : memref<1x32xf32, #tpu.memory_space<vmem>>, vector<1x32xf32>
      tpu.vector_store %arg7[%c0_23, %c0_24], %35 {strides = array<i32>} : memref<1x32xf32, #tpu.memory_space<vmem>>, vector<1x32xf32>,
      %cst_25 = arith.constant 0.000000e+00 : f32
      %37 = vector.broadcast %cst_25 : f32 to vector<1x32xf32>
      %c0_26 = arith.constant 0 : index
      %c0_27 = arith.constant 0 : index
      %38 = vector.load %arg8[%c0_26, %c0_27] : memref<1x32xf32, #tpu.memory_space<vmem>>, vector<1x32xf32>
      tpu.vector_store %arg8[%c0_26, %c0_27], %37 {strides = array<i32>} : memref<1x32xf32, #tpu.memory_space<vmem>>, vector<1x32xf32>,
    } else {
    }
    %c0 = arith.constant 0 : index
    %c0_1 = arith.constant 0 : index
    %3 = vector.load %arg3[%c0, %c0_1] : memref<32x64xf32, #tpu.memory_space<vmem>>, vector<32x64xf32>
    %c0_2 = arith.constant 0 : index
    %c0_3 = arith.constant 0 : index
    %4 = vector.load %arg2[%c0_2, %c0_3] : memref<32x64xf32, #tpu.memory_space<vmem>>, vector<32x64xf32>
    %cst = arith.constant dense<0.000000e+00> : vector<32x32xf32>
    %5 = tpu.matmul %3, %4, %cst {dimension_numbers = #tpu.dot_dimension_numbers<[1], [1], [0], [0], [0, 0, 1, 0], [], []>} : vector<32x64xf32>, vector<32x64xf32>, vector<32x32xf32> -> vector<32x32xf32>
    %6 = math.exp %5 : vector<32x32xf32>
    %c0_4 = arith.constant 0 : index
    %c0_5 = arith.constant 0 : index
    %7 = vector.load %arg5[%c0_4, %c0_5] : memref<32x1xi32, #tpu.memory_space<vmem>>, vector<32x1xi32>
    %c0_6 = arith.constant 0 : index
    %c0_7 = arith.constant 0 : index
    %8 = vector.load %arg4[%c0_6, %c0_7] : memref<1x32xi32, #tpu.memory_space<vmem>>, vector<1x32xi32>
    %9 = vector.broadcast %7 : vector<32x1xi32> to vector<32x32xi32>
    %10 = vector.broadcast %8 : vector<1x32xi32> to vector<32x32xi32>
    %11 = arith.cmpi eq, %9, %10 : vector<32x32xi32>
    %12 = arith.extui %11 : vector<32x32xi1> to vector<32x32xi32>
    %13 = arith.sitofp %12 : vector<32x32xi32> to vector<32x32xf32>
    %cst_8 = arith.constant dense<0.000000e+00> : vector<32xf32>
    %14 = vector.multi_reduction <add>, %6, %cst_8 [0] : vector<32x32xf32> to vector<32xf32>
    %15 = vector.shape_cast %14 : vector<32xf32> to vector<1x32xf32>
    %16 = arith.mulf %6, %13 : vector<32x32xf32>
    %cst_9 = arith.constant dense<0.000000e+00> : vector<32xf32>
    %17 = vector.multi_reduction <add>, %16, %cst_9 [0] : vector<32x32xf32> to vector<32xf32>
    %18 = vector.shape_cast %17 : vector<32xf32> to vector<1x32xf32>
    %cst_10 = arith.constant dense<0.000000e+00> : vector<32xf32>
    %19 = vector.multi_reduction <add>, %13, %cst_10 [0] : vector<32x32xf32> to vector<32xf32>
    %20 = vector.shape_cast %19 : vector<32xf32> to vector<1x32xf32>
    %c0_11 = arith.constant 0 : index
    %c0_12 = arith.constant 0 : index
    %21 = vector.load %arg7[%c0_11, %c0_12] : memref<1x32xf32, #tpu.memory_space<vmem>>, vector<1x32xf32>
    %cst_13 = arith.constant 3.200000e+01 : f32
    %22 = vector.broadcast %cst_13 : f32 to vector<1x32xf32>
    %23 = arith.subf %22, %20 : vector<1x32xf32>
    %24 = arith.addf %18, %23 : vector<1x32xf32>
    %25 = arith.addf %21, %24 : vector<1x32xf32>
    %c0_14 = arith.constant 0 : index
    %c0_15 = arith.constant 0 : index
    %26 = vector.load %arg7[%c0_14, %c0_15] : memref<1x32xf32, #tpu.memory_space<vmem>>, vector<1x32xf32>
    tpu.vector_store %arg7[%c0_14, %c0_15], %25 {strides = array<i32>} : memref<1x32xf32, #tpu.memory_space<vmem>>, vector<1x32xf32>,
    %c0_16 = arith.constant 0 : index
    %c0_17 = arith.constant 0 : index
    %27 = vector.load %arg8[%c0_16, %c0_17] : memref<1x32xf32, #tpu.memory_space<vmem>>, vector<1x32xf32>
    %28 = arith.subf %15, %18 : vector<1x32xf32>
    %29 = arith.addf %28, %20 : vector<1x32xf32>
    %30 = arith.addf %27, %29 : vector<1x32xf32>
    %c0_18 = arith.constant 0 : index
    %c0_19 = arith.constant 0 : index
    %31 = vector.load %arg8[%c0_18, %c0_19] : memref<1x32xf32, #tpu.memory_space<vmem>>, vector<1x32xf32>
    tpu.vector_store %arg8[%c0_18, %c0_19], %30 {strides = array<i32>} : memref<1x32xf32, #tpu.memory_space<vmem>>, vector<1x32xf32>,
    %c0_i32_20 = arith.constant 0 : i32
    %32 = arith.cmpi eq, %arg1, %c0_i32_20 : i32
    %33 = arith.extui %32 : i1 to i32
    %c0_i32_21 = arith.constant 0 : i32
    %34 = arith.cmpi ne, %33, %c0_i32_21 : i32
    scf.if %34 {
      %c0_22 = arith.constant 0 : index
      %c0_23 = arith.constant 0 : index
      %35 = vector.load %arg8[%c0_22, %c0_23] : memref<1x32xf32, #tpu.memory_space<vmem>>, vector<1x32xf32>
      %cst_24 = arith.constant 0.000000e+00 : f32
      %36 = vector.broadcast %cst_24 : f32 to vector<1x32xf32>
      %37 = arith.subf %35, %36 : vector<1x32xf32>
      %38 = math.log %37 : vector<1x32xf32>
      %c0_25 = arith.constant 0 : index
      %c0_26 = arith.constant 0 : index
      %39 = vector.load %arg7[%c0_25, %c0_26] : memref<1x32xf32, #tpu.memory_space<vmem>>, vector<1x32xf32>
      %cst_27 = arith.constant 0.000000e+00 : f32
      %40 = vector.broadcast %cst_27 : f32 to vector<1x32xf32>
      %41 = arith.subf %39, %40 : vector<1x32xf32>
      %42 = math.log %41 : vector<1x32xf32>
      %43 = arith.subf %38, %42 : vector<1x32xf32>
      %c0_28 = arith.constant 0 : index
      %c0_29 = arith.constant 0 : index
      %44 = vector.load %arg6[%c0_28, %c0_29] : memref<1x32xf32, #tpu.memory_space<vmem>>, vector<1x32xf32>
      tpu.vector_store %arg6[%c0_28, %c0_29], %43 {strides = array<i32>} : memref<1x32xf32, #tpu.memory_space<vmem>>, vector<1x32xf32>,
    } else {
    }
    return
  }
  func.func @transform_0(%arg0: i32, %arg1: i32) -> (i32, i32) {
    %c0_i32 = arith.constant 0 : i32
    %c0_i32_0 = arith.constant 0 : i32
    return %arg0, %c0_i32 : i32, i32
  }
  func.func @transform_1(%arg0: i32, %arg1: i32) -> (i32, i32) {
    %c0_i32 = arith.constant 0 : i32
    %c0_i32_0 = arith.constant 0 : i32
    return %arg1, %c0_i32 : i32, i32
  }
  func.func @transform_2(%arg0: i32, %arg1: i32) -> (i32, i32) {
    %c0_i32 = arith.constant 0 : i32
    %c0_i32_0 = arith.constant 0 : i32
    return %c0_i32, %arg0 : i32, i32
  }
  func.func @transform_3(%arg0: i32, %arg1: i32) -> (i32, i32) {
    %c0_i32 = arith.constant 0 : i32
    %c0_i32_0 = arith.constant 0 : i32
    return %arg1, %c0_i32 : i32, i32
  }
  func.func @transform_4(%arg0: i32, %arg1: i32) -> (i32, i32) {
    %c0_i32 = arith.constant 0 : i32
    %c0_i32_0 = arith.constant 0 : i32
    return %c0_i32, %arg0 : i32, i32
  }
}

</mosaic_0001>

<llo_original>
// kernel: tpu_custom_call.1
$region0: #{tpu_custom_call.1}
  #allocation0 [shape = 'u32[]', space=smem, size = 0x4, offset = 0x4, fixed_abs, tag = 'smem constant byte address 0x4 - core index']
  #allocation1 [shape = 'u32[144,128]{1,0:T(1,128)}', space=vmem, size = 0x12000, scoped, tag = 'internal scratch']
  #allocation2 [shape = 'f32[1,32]{1,0:T(1,128)}', space=vmem, size = 0x200, scoped, tag = 'scratch operand']
  #allocation3 [shape = 'f32[1,32]{1,0:T(1,128)}', space=vmem, size = 0x200, scoped, tag = 'scratch operand']
  %s0 = inlined_call_operand.vmem [shape: f32[32,64], index: 0, kind: input, shape index: {}]
  %s1 = inlined_call_operand.hbm [shape: f32[32,64], index: 1, kind: input, shape index: {}]
  %s2 = inlined_call_operand.vmem [shape: s32[1,32], index: 2, kind: input, shape index: {}]
  %s3 = inlined_call_operand.vmem [shape: s32[32,1], index: 3, kind: input, shape index: {}]
  %s4 = inlined_call_operand.hbm [shape: f32[1,32], index: 4, kind: output, shape index: {}]
  %s5 = sld [smem:[#allocation0]]
  $region38: #{tpu_custom_call.1} parent=0
    _
  %s7 = ssub.s32 1, %s5
  %s8 = scalar_select 0, %s7, %s5
  $region1: #{tpu_custom_call.1} parent=0
    #allocation4 [shape = 'u8[16384]{0}', space=vmem, size = 0x4000, scoped, tag = 'input window, operand 1, single buffered']
    #allocation5 [shape = 's32[1]{0}', space=sflag, size = 0x4, scoped, tag = 'scoped memory for tpu_custom_call.1']
    #allocation6 [shape = 's32[1]{0}', space=sflag, size = 0x4, scoped, tag = 'scoped memory for tpu_custom_call.1']
    #allocation7 [shape = 'u8[512]{0}', space=vmem, size = 0x400, scoped, tag = 'output window, operand 0, single buffered']
    %9 = vsyncpa [#allocation5], 0
    %10 = vsyncpa [#allocation6], 0
    // Predicated region
    $region2: #{tpu_custom_call.1} parent=1 // pred_check
      _
    $region3: #{tpu_custom_call.1} parent=1 // pred_check_branch
      %12 = sbr.rel (0) target = $region5
    $region4: #{tpu_custom_call.1} parent=1 // pred_region
      _
    $region5: #{tpu_custom_call.1} parent=1 // pred_fallthru
      _
    // Predicated region
    $region6: #{tpu_custom_call.1} parent=1 // pred_check
      _
    $region7: #{tpu_custom_call.1} parent=1 // pred_check_branch
      %14 = sbr.rel (0) target = $region9
    $region8: #{tpu_custom_call.1} parent=1 // pred_region
      %s16 = ssub.s32 512, 512
      %17 = vsyncadd [#allocation5], %s16
      %s18 = sshll.u32 [#allocation4], 4
      %s19 = int_to_ptr.vmem [resolvable:$true] %s18
      %24 = dma.hbm_to_vmem [thread:$0]  %s1, 512, %s19, [#allocation5], 128, 128, 8
    $region9: #{tpu_custom_call.1} parent=1 // pred_fallthru
      _
    // Predicated region
    $region10: #{tpu_custom_call.1} parent=1 // pred_check
      _
    $region11: #{tpu_custom_call.1} parent=1 // pred_check_branch
      %26 = sbr.rel (0) target = $region13
    $region12: #{tpu_custom_call.1} parent=1 // pred_region
      _
    $region13: #{tpu_custom_call.1} parent=1 // pred_fallthru
      _
    // Predicated region
    $region14: #{tpu_custom_call.1} parent=1 // pred_check
      _
    $region15: #{tpu_custom_call.1} parent=1 // pred_check_branch
      %28 = sbr.rel (0) target = $region17
    $region16: #{tpu_custom_call.1} parent=1 // pred_region
      _
    $region17: #{tpu_custom_call.1} parent=1 // pred_fallthru
      _
    // Predicated region
    $region18: #{tpu_custom_call.1} parent=1 // pred_check
      _
    $region19: #{tpu_custom_call.1} parent=1 // pred_check_branch
      %30 = sbr.rel (0) target = $region21
    $region20: #{tpu_custom_call.1} parent=1 // pred_region
      %31 = dma.done [#allocation5], 512
    $region21: #{tpu_custom_call.1} parent=1 // pred_fallthru
      _
    %p32 = scmp.eq.s32.totalorder 0, 0
    // Predicated region
    $region22: #{tpu_custom_call.1} parent=1 // pred_check
      %p33 = pneg %p32
    $region23: #{tpu_custom_call.1} parent=1 // pred_check_branch
      %35 = sbr.rel (%p33) target = $region25
    $region24: #{tpu_custom_call.1} parent=1 // pred_region
      %vm36 = vcmask 253952
      %37 = vst.msk [vmem:[#allocation2] sm:$0x1] %vm36, 0.0
      %38 = vst.msk [vmem:[#allocation3] sm:$0x1] %vm36, 0.0
    $region25: #{tpu_custom_call.1} parent=1 // pred_fallthru
      _
    %v39 = vld [vmem:[#allocation4] sm:$0xff]
    %v40 = vld [vmem:[#allocation4 + $0x8] sm:$0xff]
    %v41 = vld [vmem:[#allocation4 + $0x10] sm:$0xff]
    %v42 = vld [vmem:[#allocation4 + $0x18] sm:$0xff]
    %v43 = vld [vmem:[%s0] sm:$0xff]
    %v44 = vld [vmem:[%s0 + $0x8] sm:$0xff]
    %v45 = vld [vmem:[%s0 + $0x10] sm:$0xff]
    %v46 = vld [vmem:[%s0 + $0x18] sm:$0xff]
    %vm47 = vcmask 523264
    %v49 = vsel %vm47, %v39, 0
    %v52 = vsel %vm47, %v40, 0
    %v55 = vsel %vm47, %v41, 0
    %v58 = vsel %vm47, %v42, 0
    %v61 = vsel %vm47, %v43, 0
    %v64 = vsel %vm47, %v44, 0
    %v67 = vsel %vm47, %v45, 0
    %v70 = vsel %vm47, %v46, 0
    %72 = vmatprep.subr.mxu0 0.0
    %73 = vmatpush1.xpose.msra.mxu0 0.0
    %74 = vmatprep.subr.mxu0 0.0
    %75 = vmatpush1.xpose.msra.mxu0 0.0
    %76 = vmatprep.subr.mxu0 0.0
    %77 = vmatpush1.xpose.msra.mxu0 0.0
    %78 = vmatprep.subr.mxu0 0.0
    %79 = vmatpush1.xpose.msra.mxu0 0.0
    %80 = vmatprep.subr.mxu0 0.0
    %81 = vmatpush1.xpose.msra.mxu0 0.0
    %82 = vmatprep.subr.mxu0 0.0
    %83 = vmatpush1.xpose.msra.mxu0 0.0
    %84 = vmatprep.subr.mxu0 0.0
    %85 = vmatpush1.xpose.msra.mxu0 0.0
    %86 = vmatprep.subr.mxu0 0.0
    %87 = vmatpush1.xpose.msra.mxu0 0.0
    %88 = vmatprep.subr.mxu0 0.0
    %89 = vmatpush1.xpose.msra.mxu0 0.0
    %90 = vmatprep.subr.mxu0 0.0
    %91 = vmatpush1.xpose.msra.mxu0 0.0
    %92 = vmatprep.subr.mxu0 0.0
    %93 = vmatpush1.xpose.msra.mxu0 0.0
    %94 = vmatprep.subr.mxu0 0.0
    %95 = vmatpush1.xpose.msra.mxu0 0.0
    %96 = vmatprep.subr.mxu0 0.0
    %97 = vmatpush1.xpose.msra.mxu0 %v70
    %98 = vmatprep.subr.mxu0 0.0
    %99 = vmatpush1.xpose.msra.mxu0 %v67
    %100 = vmatprep.subr.mxu0 0.0
    %101 = vmatpush1.xpose.msra.mxu0 %v64
    %102 = vmatprep.subr.mxu0 0.0
    %103 = vmatpush1.xpose.msra.mxu0 %v61
    %104 = vmatprep.subr.mxu0 0.0
    %105 = vmatpush2.xpose.msra.mxu0 0.0
    %106 = vmatprep.subr.mxu0 0.0
    %107 = vmatpush2.xpose.msra.mxu0 0.0
    %108 = vmatprep.subr.mxu0 0.0
    %109 = vmatpush2.xpose.msra.mxu0 0.0
    %110 = vmatprep.subr.mxu0 0.0
    %111 = vmatpush2.xpose.msra.mxu0 0.0
    %112 = vmatprep.subr.mxu0 0.0
    %113 = vmatpush2.xpose.msra.mxu0 0.0
    %114 = vmatprep.subr.mxu0 0.0
    %115 = vmatpush2.xpose.msra.mxu0 0.0
    %116 = vmatprep.subr.mxu0 0.0
    %117 = vmatpush2.xpose.msra.mxu0 0.0
    %118 = vmatprep.subr.mxu0 0.0
    %119 = vmatpush2.xpose.msra.mxu0 0.0
    %120 = vmatprep.subr.mxu0 0.0
    %121 = vmatpush2.xpose.msra.mxu0 0.0
    %122 = vmatprep.subr.mxu0 0.0
    %123 = vmatpush2.xpose.msra.mxu0 0.0
    %124 = vmatprep.subr.mxu0 0.0
    %125 = vmatpush2.xpose.msra.mxu0 0.0
    %126 = vmatprep.subr.mxu0 0.0
    %127 = vmatpush2.xpose.msra.mxu0 0.0
    %128 = vmatprep.subr.mxu0 0.0
    %129 = vmatpush2.xpose.msra.mxu0 0.0
    %130 = vmatprep.subr.mxu0 0.0
    %131 = vmatpush2.xpose.msra.mxu0 0.0
    %132 = vmatprep.subr.mxu0 0.0
    %133 = vmatpush2.xpose.msra.mxu0 0.0
    %134 = vmatprep.subr.mxu0 0.0
    %135 = vmatpush2.xpose.msra.mxu0 0.0
    %136 = vmatprep.mubr.f32.mxu0 0.0
    %137 = vmatmul.mubr.f32.gmra.mxu0 %v49
    %v138 = vpop.f32.mrf.mxu0
    %v139 = vadd.f32 0.0, %v138
    %v140 = vpop.f32.mrf.mxu0
    %141 = vmatprep.mubr.f32.mxu0 0.0
    %142 = vmatmul.mubr.f32.gmra.mxu0 %v52
    %v143 = vpop.f32.mrf.mxu0
    %v144 = vadd.f32 0.0, %v143
    %v145 = vpop.f32.mrf.mxu0
    %146 = vmatprep.mubr.f32.mxu0 0.0
    %147 = vmatmul.mubr.f32.gmra.mxu0 %v55
    %v148 = vpop.f32.mrf.mxu0
    %v149 = vadd.f32 0.0, %v148
    %v150 = vpop.f32.mrf.mxu0
    %151 = vmatprep.mubr.f32.mxu0 0.0
    %152 = vmatmul.mubr.f32.gmra.mxu0 %v58
    %v153 = vpop.f32.mrf.mxu0
    %v154 = vadd.f32 0.0, %v153
    %v155 = vpop.f32.mrf.mxu0
    %156 = vdwg.mxu0
    %v157 = vmul.f32 %v139, 1.442695
    %v158 = vpow.pop %v157
    %v159 = vmul.f32 %v144, 1.442695
    %v160 = vpow.pop %v159
    %v161 = vmul.f32 %v149, 1.442695
    %v162 = vpow.pop %v161
    %v163 = vmul.f32 %v154, 1.442695
    %v164 = vpow.pop %v163
    %v165 = vld [vmem:[%s3] sm:$0xff]
    %v166 = vld [vmem:[%s3 + $0x8] sm:$0xff]
    %v167 = vld [vmem:[%s3 + $0x10] sm:$0xff]
    %v168 = vld [vmem:[%s3 + $0x18] sm:$0xff]
    %v169 = vld [vmem:[%s2] sm:$0x1]
    %170 = vset.pattern.permute.xlu0 0
    %171 = vperm.xlu0 %170, %v165
    %v172 = vpop.permute.xlu0 %171
    %173 = vset.pattern.permute.xlu0 0
    %174 = vperm.xlu0 %173, %v166
    %v175 = vpop.permute.xlu0 %174
    %176 = vset.pattern.permute.xlu0 0
    %177 = vperm.xlu0 %176, %v167
    %v178 = vpop.permute.xlu0 %177
    %179 = vset.pattern.permute.xlu0 0
    %180 = vperm.xlu0 %179, %v168
    %v181 = vpop.permute.xlu0 %180
    %v182 = vlaneseq
    %v183 = vshrl.u32 %v182, 7
    %v184 = vsub.s32 0, %v183
    %v185 = vrot.slane %v169, %v184
    %vm186 = vcmp.eq.s32.totalorder %v172, %v185
    %vm187 = vcmp.eq.s32.totalorder %v175, %v185
    %vm188 = vcmp.eq.s32.totalorder %v178, %v185
    %vm189 = vcmp.eq.s32.totalorder %v181, %v185
    %v190 = vsel %vm186, 1, 0
    %v191 = vsel %vm187, 1, 0
    %v192 = vsel %vm188, 1, 0
    %v193 = vsel %vm189, 1, 0
    %v194 = vcvt.s32.f32 %v190
    %v195 = vcvt.s32.f32 %v191
    %v196 = vcvt.s32.f32 %v192
    %v197 = vcvt.s32.f32 %v193
    %vm198 = vcmask 261120
    %v199 = vsel %vm198, %v158, 0.0
    %v200 = vsel %vm198, %v160, 0.0
    %v201 = vadd.f32 %v199, %v200
    %v202 = vsel %vm198, %v162, 0.0
    %v203 = vadd.f32 %v201, %v202
    %v204 = vsel %vm198, %v164, 0.0
    %v205 = vadd.f32 %v203, %v204
    %v206 = vrot.slane %v205, 4
    %v207 = vadd.f32 %v205, %v206
    %v208 = vrot.slane %v207, 2
    %v209 = vadd.f32 %v207, %v208
    %v210 = vrot.slane %v209, 1
    %v211 = vadd.f32 %v209, %v210
    %v212 = vmul.f32 %v158, %v194
    %v213 = vmul.f32 %v160, %v195
    %v214 = vmul.f32 %v162, %v196
    %v215 = vmul.f32 %v164, %v197
    %v216 = vsel %vm198, %v212, 0.0
    %v217 = vsel %vm198, %v213, 0.0
    %v218 = vadd.f32 %v216, %v217
    %v219 = vsel %vm198, %v214, 0.0
    %v220 = vadd.f32 %v218, %v219
    %v221 = vsel %vm198, %v215, 0.0
    %v222 = vadd.f32 %v220, %v221
    %v223 = vrot.slane %v222, 4
    %v224 = vadd.f32 %v222, %v223
    %v225 = vrot.slane %v224, 2
    %v226 = vadd.f32 %v224, %v225
    %v227 = vrot.slane %v226, 1
    %v228 = vadd.f32 %v226, %v227
    %v229 = vsel %vm198, %v194, 0.0
    %v230 = vsel %vm198, %v195, 0.0
    %v231 = vadd.f32 %v229, %v230
    %v232 = vsel %vm198, %v196, 0.0
    %v233 = vadd.f32 %v231, %v232
    %v234 = vsel %vm198, %v197, 0.0
    %v235 = vadd.f32 %v233, %v234
    %v236 = vrot.slane %v235, 4
    %v237 = vadd.f32 %v235, %v236
    %v238 = vrot.slane %v237, 2
    %v239 = vadd.f32 %v237, %v238
    %v240 = vrot.slane %v239, 1
    %v241 = vadd.f32 %v239, %v240
    %v242 = vld [vmem:[#allocation2] sm:$0x1]
    %v243 = vsub.f32 32.0, %v241
    %v244 = vadd.f32 %v228, %v243
    %v245 = vadd.f32 %v242, %v244
    %vm246 = vcmask 253952
    %247 = vst.msk [vmem:[#allocation2] sm:$0x1] %vm246, %v245
    %v248 = vld [vmem:[#allocation3] sm:$0x1]
    %v249 = vsub.f32 %v211, %v228
    %v250 = vadd.f32 %v249, %v241
    %v251 = vadd.f32 %v248, %v250
    %252 = vst.msk [vmem:[#allocation3] sm:$0x1] %vm246, %v251
    // Predicated region
    $region26: #{tpu_custom_call.1} parent=1 // pred_check
      %p253 = pneg %p32
    $region27: #{tpu_custom_call.1} parent=1 // pred_check_branch
      %255 = sbr.rel (%p253) target = $region29
    $region28: #{tpu_custom_call.1} parent=1 // pred_region
      %v256 = vld [vmem:[#allocation3] sm:$0x1]
      %v257 = vlog2.pop %v256
      %v258 = vmul.f32 %v257, 0.6931472
      %v259 = vld [vmem:[#allocation2] sm:$0x1]
      %v260 = vlog2.pop %v259
      %v261 = vmul.f32 %v260, 0.6931472
      %v262 = vsub.f32 %v258, %v261
      %263 = vst.msk [vmem:[#allocation7] sm:$0x1] %vm246, %v262
    $region29: #{tpu_custom_call.1} parent=1 // pred_fallthru
      _
    // Predicated region
    $region30: #{tpu_custom_call.1} parent=1 // pred_check
      _
    $region31: #{tpu_custom_call.1} parent=1 // pred_check_branch
      %265 = sbr.rel (0) target = $region33
    $region32: #{tpu_custom_call.1} parent=1 // pred_region
      %s267 = ssub.s32 16, 16
      %268 = vsyncadd [#allocation6], %s267
      %s270 = sshll.u32 [#allocation7], 4
      %s271 = int_to_ptr.vmem [resolvable:$true] %s270
      %273 = dma.vmem_to_hbm [thread:$0]  %s271, 16, %s4, [#allocation6]
    $region33: #{tpu_custom_call.1} parent=1 // pred_fallthru
      _
    // Predicated region
    $region34: #{tpu_custom_call.1} parent=1 // pred_check
      _
    $region35: #{tpu_custom_call.1} parent=1 // pred_check_branch
      %275 = sbr.rel (0) target = $region37
    $region36: #{tpu_custom_call.1} parent=1 // pred_region
      %276 = dma.done [#allocation6], 16
    $region37: #{tpu_custom_call.1} parent=1 // pred_fallthru
      _
    %277 = vsyncpa [#allocation5], 1
    %278 = vsyncpa [#allocation6], 1

</llo_original>
